<compile_context>
chip_gen: v7x
topology: tpu7x:2x2x1
jax: 0.10.0
libtpu: 0.0.40
codegen_flags: <defaults>
</compile_context>

<pallas_src>
import math

import jax
import jax.numpy as jnp
from jax import lax
from jax.experimental import pallas as pl
from jax.experimental.pallas import tpu as pltpu


def _round_up(x: int, m: int) -> int:
    return ((x + m - 1) // m) * m


_TM_MAX = 256  # frame rows (per operand) per tile; stacked dot uses 2*TM rows


def _vmem_limit_bytes() -> int:
    try:
        cap = int(pltpu.get_tpu_info().vmem_capacity_bytes)
    except Exception:
        cap = 64 << 20  # assume v7x-like if the query is unavailable
    return int(max(32 << 20, min(cap - (16 << 20), 96 << 20)))


# ----------------------------- Pallas kernel ------------------------------ #

def _make_spec_loss_kernel(gamma: float, use_complex: bool, tm: int, tn: int):
    """One grid step: fused dot [fin;ftg] @ [W_re|W_im], then accumulates
    lane-dense partial sums of (|Y|^g - |S|^g)^2 (lanes 0:tn) and
    |Y_g - S_g|^2 (lanes tn:2tn) into the resident (1, 8, 2*tn) output block."""
    eps2 = 1e-24  # ~ (1e-12)^2, mirrors torch's clamp_min(1e-12) on |Y|

    def mag_pow(m2):
        """Returns (|Y|^gamma, |Y|^(gamma-1) or None) with shared EUP work."""
        if gamma == 1.0:
            return jnp.sqrt(m2), None
        if gamma == 2.0:
            sc = jnp.sqrt(m2 + eps2) if use_complex else None
            return m2, sc
        if gamma == 0.5:
            rt = jnp.sqrt(m2 + eps2)                    # |Y|
            sc = lax.rsqrt(rt) if use_complex else None  # |Y|^-0.5
            return jnp.sqrt(rt), sc                      # |Y|^0.5
        if gamma == 1.5:
            rt = jnp.sqrt(m2 + eps2)                     # |Y|
            hs = jnp.sqrt(rt)                            # |Y|^0.5
            sc = hs if use_complex else None
            return rt * hs, sc                           # |Y|^1.5
        lm = jnp.log(m2 + eps2)                          # shared log
        sc = jnp.exp((0.5 * (gamma - 1.0)) * lm) if use_complex else None
        return jnp.exp((0.5 * gamma) * lm), sc

    def fold(x):
        # (tm, tn) -> (8, tn): layout-free sublane-group split + vreg adds
        # (no cross-lane / cross-sublane XLU reduction inside the kernel).
        return x.reshape(tm // 8, 8, tn).sum(axis=0)

    def kernel(f_ref, w_ref, out_ref):
        # Zero this M-tile's resident accumulator at the start of its
        # frequency (reduction) loop; written back to HBM once at the end.
        @pl.when(pl.program_id(1) == 0)
        def _init():
            out_ref[...] = jnp.zeros_like(out_ref)

        f = f_ref[0]          # (2*tm, n_fft) bf16 : [input frames ; target frames]
        w = w_ref[...]        # (n_fft, 2*tn) bf16 : [W_re | W_im]

        # Single fused MXU matmul with f32 accumulation.
        r = jnp.dot(f, w, preferred_element_type=jnp.float32)   # (2*tm, 2*tn)
        y_re, y_im = r[:tm, :tn], r[:tm, tn:]
        s_re, s_im = r[tm:, :tn], r[tm:, tn:]

        y_m2 = y_re * y_re + y_im * y_im
        s_m2 = s_re * s_re + s_im * s_im

        y_g, y_sc = mag_pow(y_m2)
        s_g, s_sc = mag_pow(s_m2)

        d = y_g - s_g
        out_ref[0, :, 0:tn] += fold(d * d)

        if use_complex:
            if gamma != 1.0:
                # Y <- |Y|^g * exp(i angle(Y)) == Y * |Y|^(g-1)
                d_re = y_re * y_sc - s_re * s_sc
                d_im = y_im * y_sc - s_im * s_sc
            else:
                d_re = y_re - s_re
                d_im = y_im - s_im
            out_ref[0, :, tn:2 * tn] += fold(d_re * d_re + d_im * d_im)

    return kernel


def _spec_loss_sums(frames, w, gamma, use_complex, tm, tn):
    """frames: (gm, 2*tm, n_fft) bf16 (stacked [in;tg] per M tile);
    w: (n_fft, gn*2*tn) bf16.  Returns (mag_sum, cplx_sum) as f32 scalars."""
    gm, two_tm, n_fft = frames.shape
    assert two_tm == 2 * tm
    gn = w.shape[1] // (2 * tn)

    out = pl.pallas_call(
        _make_spec_loss_kernel(gamma, use_complex, tm, tn),
        out_shape=jax.ShapeDtypeStruct((gm, 8, 2 * tn), jnp.float32),
        grid=(gm, gn),
        in_specs=[
            pl.BlockSpec((1, 2 * tm, n_fft), lambda i, j: (i, 0, 0)),
            pl.BlockSpec((n_fft, 2 * tn), lambda i, j: (0, j)),
        ],
        # Per-M-tile lane-dense partial rows; M (outer) is parallel so the two
        # v7x TensorCores each take a slice of the frame tiles.
        out_specs=pl.BlockSpec((1, 8, 2 * tn), lambda i, j: (i, 0, 0)),
        compiler_params=pltpu.CompilerParams(
            dimension_semantics=("parallel", "arbitrary"),
            vmem_limit_bytes=_vmem_limit_bytes(),
        ),
    )(frames, w)

    mag_sum = jnp.sum(out[:, :, :tn])
    if use_complex:
        cplx_sum = jnp.sum(out[:, :, tn:])
    else:
        cplx_sum = jnp.zeros((), jnp.float32)
    return mag_sum, cplx_sum


# ------------------------------- JAX glue --------------------------------- #

def _frame_signal(x, n_fft, hop):
    """x: (B, T) -> frames (B*n_frames, n_fft), reproducing torch.stft
    center=True with reflect padding."""
    pad = n_fft // 2
    xp = jnp.pad(x, ((0, 0), (pad, pad)), mode="reflect")
    n_frames = 1 + (xp.shape[-1] - n_fft) // hop
    idx = jnp.arange(n_frames)[:, None] * hop + jnp.arange(n_fft)[None, :]
    frames = xp[:, idx]                       # (B, n_frames, n_fft)
    return frames.reshape(-1, n_fft), n_frames


def _pick_tn(n_freq):
    """Frequency tile: minimise zero-padding, tie-break to the largest tile."""
    best_tn, best_pad = 128, _round_up(n_freq, 128)
    for tn in (256, 384, 512):
        pad = _round_up(n_freq, tn)
        if pad < best_pad or (pad == best_pad and tn > best_tn):
            best_tn, best_pad = tn, pad
    return best_tn, best_pad


def _pick_tm(m):
    """Frame tile (multiple of 16); shrink if zero-row padding is excessive."""
    tm = min(_TM_MAX, _round_up(m, 16))
    m_pad = _round_up(m, tm)
    while tm > 16 and m_pad - m > max(m // 8, 16):
        tm = max(tm // 2, 16)
        m_pad = _round_up(m, tm)
    return tm, m_pad


def _windowed_dft_basis(n_fft, tn, dtype):
    """Hann-windowed real-DFT basis with torch.stft(normalized=True) scaling,
    laid out per frequency tile as [W_re | W_im]: shape (n_fft, gn*2*tn).
    Zero-padded frequency columns contribute exactly 0 to both loss sums."""
    n_freq = n_fft // 2 + 1
    n_pad = _round_up(n_freq, tn)
    gn = n_pad // tn
    n = jnp.arange(n_fft, dtype=jnp.float32)
    k = jnp.arange(n_freq, dtype=jnp.float32)
    window = 0.5 - 0.5 * jnp.cos(2.0 * jnp.pi * n / n_fft)   # periodic hann
    ang = 2.0 * jnp.pi * n[:, None] * k[None, :] / n_fft
    scale = 1.0 / math.sqrt(n_fft)                           # normalized=True
    w_re = (window[:, None] * jnp.cos(ang)) * scale
    w_im = (-window[:, None] * jnp.sin(ang)) * scale
    pad = ((0, 0), (0, n_pad - n_freq))
    w_re = jnp.pad(w_re, pad).reshape(n_fft, gn, tn)
    w_im = jnp.pad(w_im, pad).reshape(n_fft, gn, tn)
    w = jnp.concatenate([w_re, w_im], axis=2).reshape(n_fft, gn * 2 * tn)
    return w.astype(dtype)


class MultiResSpecLoss:
    """JAX/Pallas port of the PyTorch MultiResSpecLoss forward pass."""

    def __init__(self, n_ffts, gamma=1.0, factor=1.0, f_complex=None,
                 compute_dtype=jnp.bfloat16):
        self.n_ffts = list(n_ffts)
        self.gamma = float(gamma)
        self.f = float(factor)
        self.compute_dtype = compute_dtype
        if f_complex is None or f_complex == 0:
            self.f_complex = None
        elif isinstance(f_complex, (list, tuple)):
            self.f_complex = [float(v) for v in f_complex]
        else:
            self.f_complex = [float(f_complex)] * len(self.n_ffts)

        # Cache the windowed DFT bases (device constants) per resolution.
        # TODO(synk): keep W in f32 (frames bf16) if gradient fidelity matters.
        self._basis = {}
        for n_fft in self.n_ffts:
            n_freq = n_fft // 2 + 1
            tn, _ = _pick_tn(n_freq)
            self._basis[n_fft] = (_windowed_dft_basis(n_fft, tn, compute_dtype), tn)

    def __call__(self, input, target):
        t_len = input.shape[-1]
        x = input.reshape(-1, t_len).astype(self.compute_dtype)
        y = target.reshape(-1, t_len).astype(self.compute_dtype)

        loss = jnp.zeros((), dtype=jnp.float32)
        use_complex = self.f_complex is not None
        for i, n_fft in enumerate(self.n_ffts):
            hop = n_fft // 4
            w, tn = self._basis[n_fft]
            fin, _ = _frame_signal(x, n_fft, hop)
            ftg, _ = _frame_signal(y, n_fft, hop)

            m = fin.shape[0]                       # batch * n_frames
            tm, m_pad = _pick_tm(m)
            if m_pad != m:
                # Zero rows in BOTH operands contribute exactly 0 to both sums.
                fin = jnp.pad(fin, ((0, m_pad - m), (0, 0)))
                ftg = jnp.pad(ftg, ((0, m_pad - m), (0, 0)))
            gm = m_pad // tm
            # Stack [input ; target] per M tile so the kernel does ONE fused dot.
            frames = jnp.concatenate(
                [fin.reshape(gm, tm, n_fft), ftg.reshape(gm, tm, n_fft)], axis=1)

            mag_sum, cplx_sum = _spec_loss_sums(
                frames, w, self.gamma, use_complex, tm, tn)

            n_freq = n_fft // 2 + 1
            count = m * n_freq                     # elements of |Y|
            loss = loss + (mag_sum / count) * self.f            # F.mse_loss (mean)
            if use_complex:
                # view_as_real doubles the element count.
                loss = loss + (cplx_sum / (2 * count)) * self.f_complex[i]
        return loss.astype(input.dtype)


# ------------------------- pure-JAX reference ------------------------------ #

def _reference_loss(x, t, n_ffts, gamma, factor, f_complex):
    x = jnp.asarray(x, jnp.float32)
    t = jnp.asarray(t, jnp.float32)
    if f_complex is not None and not isinstance(f_complex, (list, tuple)):
        f_complex = [float(f_complex)] * len(n_ffts)
    loss = jnp.zeros((), jnp.float32)
    for i, n_fft in enumerate(n_ffts):
        hop = n_fft // 4
        fx, _ = _frame_signal(x, n_fft, hop)
        ft, _ = _frame_signal(t, n_fft, hop)
        n = jnp.arange(n_fft, dtype=jnp.float32)
        win = 0.5 - 0.5 * jnp.cos(2.0 * jnp.pi * n / n_fft)
        Y = jnp.fft.rfft(fx * win, axis=-1) / math.sqrt(n_fft)
        S = jnp.fft.rfft(ft * win, axis=-1) / math.sqrt(n_fft)
        Ya, Sa = jnp.abs(Y), jnp.abs(S)
        if gamma != 1.0:
            Ya = jnp.maximum(Ya, 1e-12) ** gamma
            Sa = jnp.maximum(Sa, 1e-12) ** gamma
        loss = loss + jnp.mean((Ya - Sa) ** 2) * factor
        if f_complex is not None:
            if gamma != 1.0:
                Y = Ya * jnp.exp(1j * jnp.angle(Y))
                S = Sa * jnp.exp(1j * jnp.angle(S))
            d = Y - S
            loss = loss + 0.5 * jnp.mean(d.real ** 2 + d.imag ** 2) * f_complex[i]
    return loss


# --------------------------------- main ------------------------------------ #

if __name__ == "__main__":
    key = jax.random.PRNGKey(0)
    k1, k2 = jax.random.split(key)
    # Small waveform batch: (batch=2, time=256)
    x = jax.random.normal(k1, (2, 256), dtype=jnp.float32)
    t = jax.random.normal(k2, (2, 256), dtype=jnp.float32)

    n_ffts = (64, 128)
    # gamma=1.0 (no pow), 0.5 (sqrt/rsqrt chain), 0.7 (shared-log exp path).
    for gamma in (1.0, 0.5, 0.7):
        loss_mod = MultiResSpecLoss(n_ffts, gamma=gamma, factor=1.0, f_complex=1.0)
        loss_fn = jax.jit(lambda a, b: loss_mod(a, b))
        loss = loss_fn(x, t)
        jax.block_until_ready(loss)
        assert loss.shape == () and bool(jnp.isfinite(loss)), "non-finite loss"

        ref = float(jax.block_until_ready(
            _reference_loss(x, t, n_ffts, gamma, 1.0, 1.0)))
        got = float(loss)
        # Loose tolerance: kernel runs the MXU in bf16 with f32 accumulation.
        assert abs(got - ref) <= 0.1 * abs(ref) + 1e-5, (gamma, got, ref)

    print("KERNEL_OK")
</pallas_src>

<mosaic_0001>
module attributes {stable_mosaic.version = 11 : i64} {
  func.func @kernel(%arg0: i32, %arg1: i32, %arg2: memref<1x96x64xbf16, #tpu.memory_space<vmem>>, %arg3: memref<64x256xbf16, #tpu.memory_space<vmem>>, %arg4: memref<1x8x256xf32, #tpu.memory_space<vmem>>) attributes {dimension_semantics = [#tpu.dimension_semantics<parallel>, #tpu.dimension_semantics<arbitrary>], iteration_bounds = array<i64: 1, 1>, scalar_prefetch = 0 : i64, scratch_operands = 0 : i64, tpu.core_type = #tpu.core_type<tc>, window_params = [{transform_indices = @transform_0, window_bounds = array<i64: 1, 96, 64>}, {transform_indices = @transform_1, window_bounds = array<i64: 64, 256>}, {transform_indices = @transform_2, window_bounds = array<i64: 1, 8, 256>}]} {
    %c0_i32 = arith.constant 0 : i32
    %0 = arith.cmpi eq, %arg1, %c0_i32 : i32
    %1 = arith.extui %0 : i1 to i32
    %c0_i32_0 = arith.constant 0 : i32
    %2 = arith.cmpi ne, %1, %c0_i32_0 : i32
    scf.if %2 {
      %cst_18 = arith.constant 0.000000e+00 : f32
      %42 = vector.broadcast %cst_18 : f32 to vector<1x8x256xf32>
      %c0_19 = arith.constant 0 : index
      %c0_20 = arith.constant 0 : index
      %c0_21 = arith.constant 0 : index
      %43 = vector.load %arg4[%c0_19, %c0_20, %c0_21] : memref<1x8x256xf32, #tpu.memory_space<vmem>>, vector<1x8x256xf32>
      tpu.vector_store %arg4[%c0_19, %c0_20, %c0_21], %42 {strides = array<i32>} : memref<1x8x256xf32, #tpu.memory_space<vmem>>, vector<1x8x256xf32>,
    } else {
    }
    %c0 = arith.constant 0 : index
    %c0_1 = arith.constant 0 : index
    %c0_2 = arith.constant 0 : index
    %3 = vector.load %arg2[%c0, %c0_1, %c0_2] : memref<1x96x64xbf16, #tpu.memory_space<vmem>>, vector<1x96x64xbf16>
    %4 = vector.shape_cast %3 : vector<1x96x64xbf16> to vector<96x64xbf16>
    %c0_3 = arith.constant 0 : index
    %c0_4 = arith.constant 0 : index
    %5 = vector.load %arg3[%c0_3, %c0_4] : memref<64x256xbf16, #tpu.memory_space<vmem>>, vector<64x256xbf16>
    %cst = arith.constant dense<0.000000e+00> : vector<96x256xf32>
    %6 = tpu.matmul %4, %5, %cst {dimension_numbers = #tpu.dot_dimension_numbers<[1], [0], [0], [1], [0, 0, 1, 1], [], []>} : vector<96x64xbf16>, vector<64x256xbf16>, vector<96x256xf32> -> vector<96x256xf32>
    %7 = vector.extract_strided_slice %6 {offsets = [0, 0], sizes = [48, 128], strides = [1, 1]} : vector<96x256xf32> to vector<48x128xf32>
    %8 = vector.extract_strided_slice %6 {offsets = [0, 128], sizes = [48, 128], strides = [1, 1]} : vector<96x256xf32> to vector<48x128xf32>
    %9 = vector.extract_strided_slice %6 {offsets = [48, 0], sizes = [48, 128], strides = [1, 1]} : vector<96x256xf32> to vector<48x128xf32>
    %10 = vector.extract_strided_slice %6 {offsets = [48, 128], sizes = [48, 128], strides = [1, 1]} : vector<96x256xf32> to vector<48x128xf32>
    %11 = arith.mulf %7, %7 : vector<48x128xf32>
    %12 = arith.mulf %8, %8 : vector<48x128xf32>
    %13 = arith.addf %11, %12 : vector<48x128xf32>
    %14 = arith.mulf %9, %9 : vector<48x128xf32>
    %15 = arith.mulf %10, %10 : vector<48x128xf32>
    %16 = arith.addf %14, %15 : vector<48x128xf32>
    %17 = math.sqrt %13 : vector<48x128xf32>
    %18 = math.sqrt %16 : vector<48x128xf32>
    %19 = arith.subf %17, %18 : vector<48x128xf32>
    %c0_5 = arith.constant 0 : index
    %c0_6 = arith.constant 0 : index
    %c0_7 = arith.constant 0 : index
    %20 = vector.load %arg4[%c0_5, %c0_6, %c0_7] : memref<1x8x256xf32, #tpu.memory_space<vmem>>, vector<1x8x128xf32>
    %21 = vector.shape_cast %20 : vector<1x8x128xf32> to vector<8x128xf32>
    %22 = arith.mulf %19, %19 : vector<48x128xf32>
    %23 = vector.shape_cast %22 : vector<48x128xf32> to vector<6x8x128xf32>
    %cst_8 = arith.constant dense<0.000000e+00> : vector<8x128xf32>
    %24 = vector.multi_reduction <add>, %23, %cst_8 [0] : vector<6x8x128xf32> to vector<8x128xf32>
    %25 = arith.addf %21, %24 : vector<8x128xf32>
    %c0_9 = arith.constant 0 : index
    %c0_10 = arith.constant 0 : index
    %c0_11 = arith.constant 0 : index
    %26 = vector.load %arg4[%c0_9, %c0_10, %c0_11] : memref<1x8x256xf32, #tpu.memory_space<vmem>>, vector<1x8x128xf32>
    %27 = vector.shape_cast %26 : vector<1x8x128xf32> to vector<8x128xf32>
    %28 = vector.shape_cast %25 : vector<8x128xf32> to vector<1x8x128xf32>
    tpu.vector_store %arg4[%c0_9, %c0_10, %c0_11], %28 {strides = array<i32>} : memref<1x8x256xf32, #tpu.memory_space<vmem>>, vector<1x8x128xf32>,
    %29 = arith.subf %7, %9 : vector<48x128xf32>
    %30 = arith.subf %8, %10 : vector<48x128xf32>
    %c0_12 = arith.constant 0 : index
    %c0_13 = arith.constant 0 : index
    %c128 = arith.constant 128 : index
    %31 = vector.load %arg4[%c0_12, %c0_13, %c128] : memref<1x8x256xf32, #tpu.memory_space<vmem>>, vector<1x8x128xf32>
    %32 = vector.shape_cast %31 : vector<1x8x128xf32> to vector<8x128xf32>
    %33 = arith.mulf %29, %29 : vector<48x128xf32>
    %34 = arith.mulf %30, %30 : vector<48x128xf32>
    %35 = arith.addf %33, %34 : vector<48x128xf32>
    %36 = vector.shape_cast %35 : vector<48x128xf32> to vector<6x8x128xf32>
    %cst_14 = arith.constant dense<0.000000e+00> : vector<8x128xf32>
    %37 = vector.multi_reduction <add>, %36, %cst_14 [0] : vector<6x8x128xf32> to vector<8x128xf32>
    %38 = arith.addf %32, %37 : vector<8x128xf32>
    %c0_15 = arith.constant 0 : index
    %c0_16 = arith.constant 0 : index
    %c128_17 = arith.constant 128 : index
    %39 = vector.load %arg4[%c0_15, %c0_16, %c128_17] : memref<1x8x256xf32, #tpu.memory_space<vmem>>, vector<1x8x128xf32>
    %40 = vector.shape_cast %39 : vector<1x8x128xf32> to vector<8x128xf32>
    %41 = vector.shape_cast %38 : vector<8x128xf32> to vector<1x8x128xf32>
    tpu.vector_store %arg4[%c0_15, %c0_16, %c128_17], %41 {strides = array<i32>} : memref<1x8x256xf32, #tpu.memory_space<vmem>>, vector<1x8x128xf32>,
    return
  }
  func.func @transform_0(%arg0: i32, %arg1: i32) -> (i32, i32, i32) {
    %c0_i32 = arith.constant 0 : i32
    %c0_i32_0 = arith.constant 0 : i32
    %c0_i32_1 = arith.constant 0 : i32
    return %arg0, %c0_i32, %c0_i32_0 : i32, i32, i32
  }
  func.func @transform_1(%arg0: i32, %arg1: i32) -> (i32, i32) {
    %c0_i32 = arith.constant 0 : i32
    %c0_i32_0 = arith.constant 0 : i32
    return %c0_i32, %arg1 : i32, i32
  }
  func.func @transform_2(%arg0: i32, %arg1: i32) -> (i32, i32, i32) {
    %c0_i32 = arith.constant 0 : i32
    %c0_i32_0 = arith.constant 0 : i32
    %c0_i32_1 = arith.constant 0 : i32
    return %arg0, %c0_i32, %c0_i32_0 : i32, i32, i32
  }
}

module attributes {stable_mosaic.version = 11 : i64} {
  func.func @kernel(%arg0: i32, %arg1: i32, %arg2: memref<1x64x128xbf16, #tpu.memory_space<vmem>>, %arg3: memref<128x256xbf16, #tpu.memory_space<vmem>>, %arg4: memref<1x8x256xf32, #tpu.memory_space<vmem>>) attributes {dimension_semantics = [#tpu.dimension_semantics<parallel>, #tpu.dimension_semantics<arbitrary>], iteration_bounds = array<i64: 1, 1>, scalar_prefetch = 0 : i64, scratch_operands = 0 : i64, tpu.core_type = #tpu.core_type<tc>, window_params = [{transform_indices = @transform_0, window_bounds = array<i64: 1, 64, 128>}, {transform_indices = @transform_1, window_bounds = array<i64: 128, 256>}, {transform_indices = @transform_2, window_bounds = array<i64: 1, 8, 256>}]} {
    %c0_i32 = arith.constant 0 : i32
    %0 = arith.cmpi eq, %arg1, %c0_i32 : i32
    %1 = arith.extui %0 : i1 to i32
    %c0_i32_0 = arith.constant 0 : i32
    %2 = arith.cmpi ne, %1, %c0_i32_0 : i32
    scf.if %2 {
      %cst_18 = arith.constant 0.000000e+00 : f32
      %42 = vector.broadcast %cst_18 : f32 to vector<1x8x256xf32>
      %c0_19 = arith.constant 0 : index
      %c0_20 = arith.constant 0 : index
      %c0_21 = arith.constant 0 : index
      %43 = vector.load %arg4[%c0_19, %c0_20, %c0_21] : memref<1x8x256xf32, #tpu.memory_space<vmem>>, vector<1x8x256xf32>
      tpu.vector_store %arg4[%c0_19, %c0_20, %c0_21], %42 {strides = array<i32>} : memref<1x8x256xf32, #tpu.memory_space<vmem>>, vector<1x8x256xf32>,
    } else {
    }
    %c0 = arith.constant 0 : index
    %c0_1 = arith.constant 0 : index
    %c0_2 = arith.constant 0 : index
    %3 = vector.load %arg2[%c0, %c0_1, %c0_2] : memref<1x64x128xbf16, #tpu.memory_space<vmem>>, vector<1x64x128xbf16>
    %4 = vector.shape_cast %3 : vector<1x64x128xbf16> to vector<64x128xbf16>
    %c0_3 = arith.constant 0 : index
    %c0_4 = arith.constant 0 : index
    %5 = vector.load %arg3[%c0_3, %c0_4] : memref<128x256xbf16, #tpu.memory_space<vmem>>, vector<128x256xbf16>
    %cst = arith.constant dense<0.000000e+00> : vector<64x256xf32>
    %6 = tpu.matmul %4, %5, %cst {dimension_numbers = #tpu.dot_dimension_numbers<[1], [0], [0], [1], [0, 0, 1, 1], [], []>} : vector<64x128xbf16>, vector<128x256xbf16>, vector<64x256xf32> -> vector<64x256xf32>
    %7 = vector.extract_strided_slice %6 {offsets = [0, 0], sizes = [32, 128], strides = [1, 1]} : vector<64x256xf32> to vector<32x128xf32>
    %8 = vector.extract_strided_slice %6 {offsets = [0, 128], sizes = [32, 128], strides = [1, 1]} : vector<64x256xf32> to vector<32x128xf32>
    %9 = vector.extract_strided_slice %6 {offsets = [32, 0], sizes = [32, 128], strides = [1, 1]} : vector<64x256xf32> to vector<32x128xf32>
    %10 = vector.extract_strided_slice %6 {offsets = [32, 128], sizes = [32, 128], strides = [1, 1]} : vector<64x256xf32> to vector<32x128xf32>
    %11 = arith.mulf %7, %7 : vector<32x128xf32>
    %12 = arith.mulf %8, %8 : vector<32x128xf32>
    %13 = arith.addf %11, %12 : vector<32x128xf32>
    %14 = arith.mulf %9, %9 : vector<32x128xf32>
    %15 = arith.mulf %10, %10 : vector<32x128xf32>
    %16 = arith.addf %14, %15 : vector<32x128xf32>
    %17 = math.sqrt %13 : vector<32x128xf32>
    %18 = math.sqrt %16 : vector<32x128xf32>
    %19 = arith.subf %17, %18 : vector<32x128xf32>
    %c0_5 = arith.constant 0 : index
    %c0_6 = arith.constant 0 : index
    %c0_7 = arith.constant 0 : index
    %20 = vector.load %arg4[%c0_5, %c0_6, %c0_7] : memref<1x8x256xf32, #tpu.memory_space<vmem>>, vector<1x8x128xf32>
    %21 = vector.shape_cast %20 : vector<1x8x128xf32> to vector<8x128xf32>
    %22 = arith.mulf %19, %19 : vector<32x128xf32>
    %23 = vector.shape_cast %22 : vector<32x128xf32> to vector<4x8x128xf32>
    %cst_8 = arith.constant dense<0.000000e+00> : vector<8x128xf32>
    %24 = vector.multi_reduction <add>, %23, %cst_8 [0] : vector<4x8x128xf32> to vector<8x128xf32>
    %25 = arith.addf %21, %24 : vector<8x128xf32>
    %c0_9 = arith.constant 0 : index
    %c0_10 = arith.constant 0 : index
    %c0_11 = arith.constant 0 : index
    %26 = vector.load %arg4[%c0_9, %c0_10, %c0_11] : memref<1x8x256xf32, #tpu.memory_space<vmem>>, vector<1x8x128xf32>
    %27 = vector.shape_cast %26 : vector<1x8x128xf32> to vector<8x128xf32>
    %28 = vector.shape_cast %25 : vector<8x128xf32> to vector<1x8x128xf32>
    tpu.vector_store %arg4[%c0_9, %c0_10, %c0_11], %28 {strides = array<i32>} : memref<1x8x256xf32, #tpu.memory_space<vmem>>, vector<1x8x128xf32>,
    %29 = arith.subf %7, %9 : vector<32x128xf32>
    %30 = arith.subf %8, %10 : vector<32x128xf32>
    %c0_12 = arith.constant 0 : index
    %c0_13 = arith.constant 0 : index
    %c128 = arith.constant 128 : index
    %31 = vector.load %arg4[%c0_12, %c0_13, %c128] : memref<1x8x256xf32, #tpu.memory_space<vmem>>, vector<1x8x128xf32>
    %32 = vector.shape_cast %31 : vector<1x8x128xf32> to vector<8x128xf32>
    %33 = arith.mulf %29, %29 : vector<32x128xf32>
    %34 = arith.mulf %30, %30 : vector<32x128xf32>
    %35 = arith.addf %33, %34 : vector<32x128xf32>
    %36 = vector.shape_cast %35 : vector<32x128xf32> to vector<4x8x128xf32>
    %cst_14 = arith.constant dense<0.000000e+00> : vector<8x128xf32>
    %37 = vector.multi_reduction <add>, %36, %cst_14 [0] : vector<4x8x128xf32> to vector<8x128xf32>
    %38 = arith.addf %32, %37 : vector<8x128xf32>
    %c0_15 = arith.constant 0 : index
    %c0_16 = arith.constant 0 : index
    %c128_17 = arith.constant 128 : index
    %39 = vector.load %arg4[%c0_15, %c0_16, %c128_17] : memref<1x8x256xf32, #tpu.memory_space<vmem>>, vector<1x8x128xf32>
    %40 = vector.shape_cast %39 : vector<1x8x128xf32> to vector<8x128xf32>
    %41 = vector.shape_cast %38 : vector<8x128xf32> to vector<1x8x128xf32>
    tpu.vector_store %arg4[%c0_15, %c0_16, %c128_17], %41 {strides = array<i32>} : memref<1x8x256xf32, #tpu.memory_space<vmem>>, vector<1x8x128xf32>,
    return
  }
  func.func @transform_0(%arg0: i32, %arg1: i32) -> (i32, i32, i32) {
    %c0_i32 = arith.constant 0 : i32
    %c0_i32_0 = arith.constant 0 : i32
    %c0_i32_1 = arith.constant 0 : i32
    return %arg0, %c0_i32, %c0_i32_0 : i32, i32, i32
  }
  func.func @transform_1(%arg0: i32, %arg1: i32) -> (i32, i32) {
    %c0_i32 = arith.constant 0 : i32
    %c0_i32_0 = arith.constant 0 : i32
    return %c0_i32, %arg1 : i32, i32
  }
  func.func @transform_2(%arg0: i32, %arg1: i32) -> (i32, i32, i32) {
    %c0_i32 = arith.constant 0 : i32
    %c0_i32_0 = arith.constant 0 : i32
    %c0_i32_1 = arith.constant 0 : i32
    return %arg0, %c0_i32, %c0_i32_0 : i32, i32, i32
  }
}

</mosaic_0001>

<llo_original>
// kernel: _lambda_.2
$region0: #{_lambda_.2}
  #allocation0 [shape = 'u32[]', space=smem, size = 0x4, offset = 0x4, fixed_abs, tag = 'smem constant byte address 0x4 - core index']
  #allocation1 [shape = 'u32[144,128]{1,0:T(1,128)}', space=vmem, size = 0x12000, scoped, tag = 'internal scratch']
  %s0 = inlined_call_operand.vmem [shape: bf16[1,96,64], index: 0, kind: input, shape index: {}]
  %s1 = inlined_call_operand.vmem [shape: bf16[64,256], index: 1, kind: input, shape index: {}]
  %s2 = inlined_call_operand.vmem [shape: f32[1,8,256], index: 2, kind: output, shape index: {}]
  %s3 = sld [smem:[#allocation0]]
  $region22: #{_lambda_.2} parent=0
    _
  %s5 = ssub.s32 1, %s3
  %s6 = scalar_select 0, %s5, %s3
  // Predicated region
  $region2: #{_lambda_.2} parent=0 // pred_check
    _
  $region3: #{_lambda_.2} parent=0 // pred_check_branch
    %8 = sbr.rel (0) target = $region5
  $region4: #{_lambda_.2} parent=0 // pred_region
    _
  $region5: #{_lambda_.2} parent=0 // pred_fallthru
    _
  // Predicated region
  $region6: #{_lambda_.2} parent=0 // pred_check
    _
  $region7: #{_lambda_.2} parent=0 // pred_check_branch
    %10 = sbr.rel (0) target = $region9
  $region8: #{_lambda_.2} parent=0 // pred_region
    _
  $region9: #{_lambda_.2} parent=0 // pred_fallthru
    _
  %p12 = scmp.eq.s32.totalorder 0, 0
  // Predicated region
  $region10: #{_lambda_.2} parent=0 // pred_check
    %p13 = pneg %p12
  $region11: #{_lambda_.2} parent=0 // pred_check_branch
    %15 = sbr.rel (%p13) target = $region13
  $region12: #{_lambda_.2} parent=0 // pred_region
    %16 = vst [vmem:[%s2] sm:$0xff] 0.0
    %17 = vst [vmem:[%s2 + $0x8] sm:$0xff] 0.0
  $region13: #{_lambda_.2} parent=0 // pred_fallthru
    _
  %v18 = vld [vmem:[%s0] sm:$0xf]
  %v19 = vld [vmem:[%s0 + $0x4] sm:$0xf]
  %v20 = vld [vmem:[%s0 + $0x8] sm:$0xf]
  %v21 = vld [vmem:[%s0 + $0xc] sm:$0xf]
  %v22 = vld [vmem:[%s0 + $0x10] sm:$0xf]
  %v23 = vld [vmem:[%s0 + $0x14] sm:$0xf]
  %v24 = vld [vmem:[%s0 + $0x18] sm:$0xf]
  %v25 = vld [vmem:[%s0 + $0x1c] sm:$0xf]
  %v26 = vld [vmem:[%s0 + $0x20] sm:$0xf]
  %v27 = vld [vmem:[%s0 + $0x24] sm:$0xf]
  %v28 = vld [vmem:[%s0 + $0x28] sm:$0xf]
  %v29 = vld [vmem:[%s0 + $0x2c] sm:$0xf]
  %v30 = vld [vmem:[%s1] sm:$0xff]
  %v31 = vld [vmem:[%s1 + $0x8] sm:$0xff]
  %v32 = vld [vmem:[%s1 + $0x10] sm:$0xff]
  %v33 = vld [vmem:[%s1 + $0x18] sm:$0xff]
  %v34 = vld [vmem:[%s1 + $0x20] sm:$0xff]
  %v35 = vld [vmem:[%s1 + $0x28] sm:$0xff]
  %v36 = vld [vmem:[%s1 + $0x30] sm:$0xff]
  %v37 = vld [vmem:[%s1 + $0x38] sm:$0xff]
  %v50 = vunpack.c.l.b16 %v18
  %v51 = vunpack.c.l.b16 %v19
  %v52 = vunpack.c.l.b16 %v20
  %v53 = vunpack.c.l.b16 %v21
  %v54 = vunpack.c.l.b16 %v22
  %v55 = vunpack.c.l.b16 %v23
  %v56 = vunpack.c.l.b16 %v24
  %v57 = vunpack.c.l.b16 %v25
  %v58 = vunpack.c.l.b16 %v26
  %v59 = vunpack.c.l.b16 %v27
  %v60 = vunpack.c.l.b16 %v28
  %v61 = vunpack.c.l.b16 %v29
  %v62 = vpack.c.b16 %v51, %v50
  %v63 = vpack.c.b16 %v53, %v52
  %v64 = vpack.c.b16 %v55, %v54
  %v65 = vpack.c.b16 %v57, %v56
  %v66 = vpack.c.b16 %v59, %v58
  %v67 = vpack.c.b16 %v61, %v60
  %v76 = vunpack.c.l.b16 %v30
  %v77 = vunpack.c.h.b16 %v30
  %v78 = vunpack.c.l.b16 %v31
  %v79 = vunpack.c.h.b16 %v31
  %v80 = vunpack.c.l.b16 %v32
  %v81 = vunpack.c.h.b16 %v32
  %v82 = vunpack.c.l.b16 %v33
  %v83 = vunpack.c.h.b16 %v33
  %v84 = vunpack.c.l.b16 %v34
  %v85 = vunpack.c.h.b16 %v34
  %v86 = vunpack.c.l.b16 %v35
  %v87 = vunpack.c.h.b16 %v35
  %v88 = vunpack.c.l.b16 %v36
  %v89 = vunpack.c.h.b16 %v36
  %v90 = vunpack.c.l.b16 %v37
  %v91 = vunpack.c.h.b16 %v37
  %v92 = vpack.c.b16 %v78, %v76
  %v93 = vpack.c.b16 %v79, %v77
  %v94 = vpack.c.b16 %v82, %v80
  %v95 = vpack.c.b16 %v83, %v81
  %v96 = vpack.c.b16 %v86, %v84
  %v97 = vpack.c.b16 %v87, %v85
  %v98 = vpack.c.b16 %v90, %v88
  %v99 = vpack.c.b16 %v91, %v89
  %vm108 = vcmask 523264
  %v110 = vsel %vm108, %v62, 0
  %v113 = vsel %vm108, %v63, 0
  %v116 = vsel %vm108, %v64, 0
  %v119 = vsel %vm108, %v65, 0
  %v122 = vsel %vm108, %v66, 0
  %v125 = vsel %vm108, %v67, 0
  %127 = vmatprep.subr.bf16.mxu0 %v93
  %128 = vmatpush1.bf16.msra.mxu0 %v92
  %129 = vmatprep.subr.bf16.mxu0 %v95
  %130 = vmatpush1.bf16.msra.mxu0 %v94
  %131 = vmatprep.subr.bf16.mxu0 %v97
  %132 = vmatpush1.bf16.msra.mxu0 %v96
  %133 = vmatprep.subr.bf16.mxu0 %v99
  %134 = vmatpush1.bf16.msra.mxu0 %v98
  %135 = vmatprep.subr.bf16.mxu0 0
  %136 = vmatpush1.bf16.msra.mxu0 0
  %137 = vmatprep.subr.bf16.mxu0 0
  %138 = vmatpush1.bf16.msra.mxu0 0
  %139 = vmatprep.subr.bf16.mxu0 0
  %140 = vmatpush1.bf16.msra.mxu0 0
  %141 = vmatprep.subr.bf16.mxu0 0
  %142 = vmatpush1.bf16.msra.mxu0 0
  %143 = vmatprep.subr.bf16.mxu0 0
  %144 = vmatpush1.bf16.msra.mxu0 0
  %145 = vmatprep.subr.bf16.mxu0 0
  %146 = vmatpush1.bf16.msra.mxu0 0
  %147 = vmatprep.subr.bf16.mxu0 0
  %148 = vmatpush1.bf16.msra.mxu0 0
  %149 = vmatprep.subr.bf16.mxu0 0
  %150 = vmatpush1.bf16.msra.mxu0 0
  %151 = vmatprep.subr.bf16.mxu0 0
  %152 = vmatpush1.bf16.msra.mxu0 0
  %153 = vmatprep.subr.bf16.mxu0 0
  %154 = vmatpush1.bf16.msra.mxu0 0
  %155 = vmatprep.subr.bf16.mxu0 0
  %156 = vmatpush1.bf16.msra.mxu0 0
  %157 = vmatprep.subr.bf16.mxu0 0
  %158 = vmatpush1.bf16.msra.mxu0 0
  %159 = vmatprep.mubr.bf16.mxu0 0
  %160 = vmatmul.mubr.bf16.gmra.mrb[0].mxu0 %v110
  %v161 = vpop.f32.mrb[0].mxu0
  %v162 = vadd.f32 0.0, %v161
  %v163 = vpop.f32.mrb[0].mxu0
  %v164 = vadd.f32 0.0, %v163
  %v165 = vpop.f32.mrb[0].mxu0
  %v166 = vadd.f32 0.0, %v165
  %v167 = vpop.f32.mrb[0].mxu0
  %v168 = vadd.f32 0.0, %v167
  %169 = vmatprep.mubr.bf16.mxu0 0
  %170 = vmatmul.mubr.bf16.gmra.mrb[0].mxu0 %v113
  %v171 = vpop.f32.mrb[0].mxu0
  %v172 = vadd.f32 0.0, %v171
  %v173 = vpop.f32.mrb[0].mxu0
  %v174 = vadd.f32 0.0, %v173
  %v175 = vpop.f32.mrb[0].mxu0
  %v176 = vadd.f32 0.0, %v175
  %v177 = vpop.f32.mrb[0].mxu0
  %v178 = vadd.f32 0.0, %v177
  %179 = vmatprep.mubr.bf16.mxu0 0
  %180 = vmatmul.mubr.bf16.gmra.mrb[0].mxu0 %v116
  %v181 = vpop.f32.mrb[0].mxu0
  %v182 = vadd.f32 0.0, %v181
  %v183 = vpop.f32.mrb[0].mxu0
  %v184 = vadd.f32 0.0, %v183
  %v185 = vpop.f32.mrb[0].mxu0
  %v186 = vadd.f32 0.0, %v185
  %v187 = vpop.f32.mrb[0].mxu0
  %v188 = vadd.f32 0.0, %v187
  %189 = vmatprep.mubr.bf16.mxu0 0
  %190 = vmatmul.mubr.bf16.gmra.mrb[0].mxu0 %v119
  %v191 = vpop.f32.mrb[0].mxu0
  %v192 = vadd.f32 0.0, %v191
  %v193 = vpop.f32.mrb[0].mxu0
  %v194 = vadd.f32 0.0, %v193
  %v195 = vpop.f32.mrb[0].mxu0
  %v196 = vadd.f32 0.0, %v195
  %v197 = vpop.f32.mrb[0].mxu0
  %v198 = vadd.f32 0.0, %v197
  %199 = vmatprep.mubr.bf16.mxu0 0
  %200 = vmatmul.mubr.bf16.gmra.mrb[0].mxu0 %v122
  %v201 = vpop.f32.mrb[0].mxu0
  %v202 = vadd.f32 0.0, %v201
  %v203 = vpop.f32.mrb[0].mxu0
  %v204 = vadd.f32 0.0, %v203
  %v205 = vpop.f32.mrb[0].mxu0
  %v206 = vadd.f32 0.0, %v205
  %v207 = vpop.f32.mrb[0].mxu0
  %v208 = vadd.f32 0.0, %v207
  %209 = vmatprep.mubr.bf16.mxu0 0
  %210 = vmatmul.mubr.bf16.gmra.mrb[0].mxu0 %v125
  %v211 = vpop.f32.mrb[0].mxu0
  %v212 = vadd.f32 0.0, %v211
  %v213 = vpop.f32.mrb[0].mxu0
  %v214 = vadd.f32 0.0, %v213
  %v215 = vpop.f32.mrb[0].mxu0
  %v216 = vadd.f32 0.0, %v215
  %v217 = vpop.f32.mrb[0].mxu0
  %v218 = vadd.f32 0.0, %v217
  %219 = vdwg.mxu0
  %v220 = vmul.f32 %v162, %v162
  %v221 = vmul.f32 %v166, %v166
  %v222 = vmul.f32 %v172, %v172
  %v223 = vmul.f32 %v176, %v176
  %v224 = vmul.f32 %v182, %v182
  %v225 = vmul.f32 %v186, %v186
  %v226 = vmul.f32 %v164, %v164
  %v227 = vmul.f32 %v168, %v168
  %v228 = vmul.f32 %v174, %v174
  %v229 = vmul.f32 %v178, %v178
  %v230 = vmul.f32 %v184, %v184
  %v231 = vmul.f32 %v188, %v188
  %v232 = vadd.f32 %v220, %v226
  %v233 = vadd.f32 %v221, %v227
  %v234 = vadd.f32 %v222, %v228
  %v235 = vadd.f32 %v223, %v229
  %v236 = vadd.f32 %v224, %v230
  %v237 = vadd.f32 %v225, %v231
  %v238 = vmul.f32 %v192, %v192
  %v239 = vmul.f32 %v196, %v196
  %v240 = vmul.f32 %v202, %v202
  %v241 = vmul.f32 %v206, %v206
  %v242 = vmul.f32 %v212, %v212
  %v243 = vmul.f32 %v216, %v216
  %v244 = vmul.f32 %v194, %v194
  %v245 = vmul.f32 %v198, %v198
  %v246 = vmul.f32 %v204, %v204
  %v247 = vmul.f32 %v208, %v208
  %v248 = vmul.f32 %v214, %v214
  %v249 = vmul.f32 %v218, %v218
  %v250 = vadd.f32 %v238, %v244
  %v251 = vadd.f32 %v239, %v245
  %v252 = vadd.f32 %v240, %v246
  %v253 = vadd.f32 %v241, %v247
  %v254 = vadd.f32 %v242, %v248
  %v255 = vadd.f32 %v243, %v249
  %v256 = vrsqrt.pop %v232
  %v257 = vmul.f32 %v232, %v256
  %vm258 = vcmp.eq.f32.partialorder %v232, inf
  %v259 = vsel %vm258, %v232, %v257
  %vm260 = vcmp.eq.f32.partialorder %v232, 0.0
  %v261 = vand.u32 %v232, 2147483648
  %v262 = vsel %vm260, %v261, %v259
  %v263 = vrsqrt.pop %v233
  %v264 = vmul.f32 %v233, %v263
  %vm265 = vcmp.eq.f32.partialorder %v233, inf
  %v266 = vsel %vm265, %v233, %v264
  %vm267 = vcmp.eq.f32.partialorder %v233, 0.0
  %v268 = vand.u32 %v233, 2147483648
  %v269 = vsel %vm267, %v268, %v266
  %v270 = vrsqrt.pop %v234
  %v271 = vmul.f32 %v234, %v270
  %vm272 = vcmp.eq.f32.partialorder %v234, inf
  %v273 = vsel %vm272, %v234, %v271
  %vm274 = vcmp.eq.f32.partialorder %v234, 0.0
  %v275 = vand.u32 %v234, 2147483648
  %v276 = vsel %vm274, %v275, %v273
  %v277 = vrsqrt.pop %v235
  %v278 = vmul.f32 %v235, %v277
  %vm279 = vcmp.eq.f32.partialorder %v235, inf
  %v280 = vsel %vm279, %v235, %v278
  %vm281 = vcmp.eq.f32.partialorder %v235, 0.0
  %v282 = vand.u32 %v235, 2147483648
  %v283 = vsel %vm281, %v282, %v280
  %v284 = vrsqrt.pop %v236
  %v285 = vmul.f32 %v236, %v284
  %vm286 = vcmp.eq.f32.partialorder %v236, inf
  %v287 = vsel %vm286, %v236, %v285
  %vm288 = vcmp.eq.f32.partialorder %v236, 0.0
  %v289 = vand.u32 %v236, 2147483648
  %v290 = vsel %vm288, %v289, %v287
  %v291 = vrsqrt.pop %v237
  %v292 = vmul.f32 %v237, %v291
  %vm293 = vcmp.eq.f32.partialorder %v237, inf
  %v294 = vsel %vm293, %v237, %v292
  %vm295 = vcmp.eq.f32.partialorder %v237, 0.0
  %v296 = vand.u32 %v237, 2147483648
  %v297 = vsel %vm295, %v296, %v294
  %v298 = vrsqrt.pop %v250
  %v299 = vmul.f32 %v250, %v298
  %vm300 = vcmp.eq.f32.partialorder %v250, inf
  %v301 = vsel %vm300, %v250, %v299
  %vm302 = vcmp.eq.f32.partialorder %v250, 0.0
  %v303 = vand.u32 %v250, 2147483648
  %v304 = vsel %vm302, %v303, %v301
  %v305 = vrsqrt.pop %v251
  %v306 = vmul.f32 %v251, %v305
  %vm307 = vcmp.eq.f32.partialorder %v251, inf
  %v308 = vsel %vm307, %v251, %v306
  %vm309 = vcmp.eq.f32.partialorder %v251, 0.0
  %v310 = vand.u32 %v251, 2147483648
  %v311 = vsel %vm309, %v310, %v308
  %v312 = vrsqrt.pop %v252
  %v313 = vmul.f32 %v252, %v312
  %vm314 = vcmp.eq.f32.partialorder %v252, inf
  %v315 = vsel %vm314, %v252, %v313
  %vm316 = vcmp.eq.f32.partialorder %v252, 0.0
  %v317 = vand.u32 %v252, 2147483648
  %v318 = vsel %vm316, %v317, %v315
  %v319 = vrsqrt.pop %v253
  %v320 = vmul.f32 %v253, %v319
  %vm321 = vcmp.eq.f32.partialorder %v253, inf
  %v322 = vsel %vm321, %v253, %v320
  %vm323 = vcmp.eq.f32.partialorder %v253, 0.0
  %v324 = vand.u32 %v253, 2147483648
  %v325 = vsel %vm323, %v324, %v322
  %v326 = vrsqrt.pop %v254
  %v327 = vmul.f32 %v254, %v326
  %vm328 = vcmp.eq.f32.partialorder %v254, inf
  %v329 = vsel %vm328, %v254, %v327
  %vm330 = vcmp.eq.f32.partialorder %v254, 0.0
  %v331 = vand.u32 %v254, 2147483648
  %v332 = vsel %vm330, %v331, %v329
  %v333 = vrsqrt.pop %v255
  %v334 = vmul.f32 %v255, %v333
  %vm335 = vcmp.eq.f32.partialorder %v255, inf
  %v336 = vsel %vm335, %v255, %v334
  %vm337 = vcmp.eq.f32.partialorder %v255, 0.0
  %v338 = vand.u32 %v255, 2147483648
  %v339 = vsel %vm337, %v338, %v336
  %v340 = vsub.f32 %v262, %v304
  %v341 = vsub.f32 %v269, %v311
  %v342 = vsub.f32 %v276, %v318
  %v343 = vsub.f32 %v283, %v325
  %v344 = vsub.f32 %v290, %v332
  %v345 = vsub.f32 %v297, %v339
  %v346 = vld [vmem:[%s2] sm:$0xff]
  %v347 = vmul.f32 %v340, %v340
  %v348 = vmul.f32 %v341, %v341
  %v349 = vmul.f32 %v342, %v342
  %v350 = vmul.f32 %v343, %v343
  %v351 = vmul.f32 %v344, %v344
  %v352 = vmul.f32 %v345, %v345
  %v353 = vadd.f32 %v347, %v348
  %v354 = vadd.f32 %v353, %v349
  %v355 = vadd.f32 %v354, %v350
  %v356 = vadd.f32 %v355, %v351
  %v357 = vadd.f32 %v356, %v352
  %v358 = vadd.f32 %v346, %v357
  %359 = vst [vmem:[%s2] sm:$0xff] %v358
  %v360 = vsub.f32 %v162, %v192
  %v361 = vsub.f32 %v166, %v196
  %v362 = vsub.f32 %v172, %v202
  %v363 = vsub.f32 %v176, %v206
  %v364 = vsub.f32 %v182, %v212
  %v365 = vsub.f32 %v186, %v216
  %v366 = vsub.f32 %v164, %v194
  %v367 = vsub.f32 %v168, %v198
  %v368 = vsub.f32 %v174, %v204
  %v369 = vsub.f32 %v178, %v208
  %v370 = vsub.f32 %v184, %v214
  %v371 = vsub.f32 %v188, %v218
  %v372 = vld [vmem:[%s2 + $0x8] sm:$0xff]
  %v373 = vmul.f32 %v360, %v360
  %v374 = vmul.f32 %v361, %v361
  %v375 = vmul.f32 %v362, %v362
  %v376 = vmul.f32 %v363, %v363
  %v377 = vmul.f32 %v364, %v364
  %v378 = vmul.f32 %v365, %v365
  %v379 = vmul.f32 %v366, %v366
  %v380 = vmul.f32 %v367, %v367
  %v381 = vmul.f32 %v368, %v368
  %v382 = vmul.f32 %v369, %v369
  %v383 = vmul.f32 %v370, %v370
  %v384 = vmul.f32 %v371, %v371
  %v385 = vadd.f32 %v373, %v379
  %v386 = vadd.f32 %v374, %v380
  %v387 = vadd.f32 %v375, %v381
  %v388 = vadd.f32 %v376, %v382
  %v389 = vadd.f32 %v377, %v383
  %v390 = vadd.f32 %v378, %v384
  %v391 = vadd.f32 %v385, %v386
  %v392 = vadd.f32 %v391, %v387
  %v393 = vadd.f32 %v392, %v388
  %v394 = vadd.f32 %v393, %v389
  %v395 = vadd.f32 %v394, %v390
  %v396 = vadd.f32 %v372, %v395
  %397 = vst [vmem:[%s2 + $0x8] sm:$0xff] %v396
  // Predicated region
  $region14: #{_lambda_.2} parent=0 // pred_check
    _
  $region15: #{_lambda_.2} parent=0 // pred_check_branch
    %399 = sbr.rel (0) target = $region17
  $region16: #{_lambda_.2} parent=0 // pred_region
    _
  $region17: #{_lambda_.2} parent=0 // pred_fallthru
    _
  // Predicated region
  $region18: #{_lambda_.2} parent=0 // pred_check
    _
  $region19: #{_lambda_.2} parent=0 // pred_check_branch
    %401 = sbr.rel (0) target = $region21
  $region20: #{_lambda_.2} parent=0 // pred_region
    _
  $region21: #{_lambda_.2} parent=0 // pred_fallthru
    _

// kernel: _lambda_.3
$region0: #{_lambda_.3}
  #allocation0 [shape = 'u32[]', space=smem, size = 0x4, offset = 0x4, fixed_abs, tag = 'smem constant byte address 0x4 - core index']
  #allocation1 [shape = 'u32[144,128]{1,0:T(1,128)}', space=vmem, size = 0x12000, scoped, tag = 'internal scratch']
  %s0 = inlined_call_operand.vmem [shape: bf16[1,64,128], index: 0, kind: input, shape index: {}]
  %s1 = inlined_call_operand.vmem [shape: bf16[128,256], index: 1, kind: input, shape index: {}]
  %s2 = inlined_call_operand.vmem [shape: f32[1,8,256], index: 2, kind: output, shape index: {}]
  %s3 = sld [smem:[#allocation0]]
  $region22: #{_lambda_.3} parent=0
    _
  %s5 = ssub.s32 1, %s3
  %s6 = scalar_select 0, %s5, %s3
  // Predicated region
  $region2: #{_lambda_.3} parent=0 // pred_check
    _
  $region3: #{_lambda_.3} parent=0 // pred_check_branch
    %8 = sbr.rel (0) target = $region5
  $region4: #{_lambda_.3} parent=0 // pred_region
    _
  $region5: #{_lambda_.3} parent=0 // pred_fallthru
    _
  // Predicated region
  $region6: #{_lambda_.3} parent=0 // pred_check
    _
  $region7: #{_lambda_.3} parent=0 // pred_check_branch
    %10 = sbr.rel (0) target = $region9
  $region8: #{_lambda_.3} parent=0 // pred_region
    _
  $region9: #{_lambda_.3} parent=0 // pred_fallthru
    _
  %p12 = scmp.eq.s32.totalorder 0, 0
  // Predicated region
  $region10: #{_lambda_.3} parent=0 // pred_check
    %p13 = pneg %p12
  $region11: #{_lambda_.3} parent=0 // pred_check_branch
    %15 = sbr.rel (%p13) target = $region13
  $region12: #{_lambda_.3} parent=0 // pred_region
    %16 = vst [vmem:[%s2] sm:$0xff] 0.0
    %17 = vst [vmem:[%s2 + $0x8] sm:$0xff] 0.0
  $region13: #{_lambda_.3} parent=0 // pred_fallthru
    _
  %v18 = vld [vmem:[%s0] sm:$0xf]
  %v19 = vld [vmem:[%s0 + $0x4] sm:$0xf]
  %v20 = vld [vmem:[%s0 + $0x8] sm:$0xf]
  %v21 = vld [vmem:[%s0 + $0xc] sm:$0xf]
  %v22 = vld [vmem:[%s0 + $0x10] sm:$0xf]
  %v23 = vld [vmem:[%s0 + $0x14] sm:$0xf]
  %v24 = vld [vmem:[%s0 + $0x18] sm:$0xf]
  %v25 = vld [vmem:[%s0 + $0x1c] sm:$0xf]
  %v26 = vld [vmem:[%s1] sm:$0xff]
  %v27 = vld [vmem:[%s1 + $0x8] sm:$0xff]
  %v28 = vld [vmem:[%s1 + $0x10] sm:$0xff]
  %v29 = vld [vmem:[%s1 + $0x18] sm:$0xff]
  %v30 = vld [vmem:[%s1 + $0x20] sm:$0xff]
  %v31 = vld [vmem:[%s1 + $0x28] sm:$0xff]
  %v32 = vld [vmem:[%s1 + $0x30] sm:$0xff]
  %v33 = vld [vmem:[%s1 + $0x38] sm:$0xff]
  %v34 = vld [vmem:[%s1 + $0x40] sm:$0xff]
  %v35 = vld [vmem:[%s1 + $0x48] sm:$0xff]
  %v36 = vld [vmem:[%s1 + $0x50] sm:$0xff]
  %v37 = vld [vmem:[%s1 + $0x58] sm:$0xff]
  %v38 = vld [vmem:[%s1 + $0x60] sm:$0xff]
  %v39 = vld [vmem:[%s1 + $0x68] sm:$0xff]
  %v40 = vld [vmem:[%s1 + $0x70] sm:$0xff]
  %v41 = vld [vmem:[%s1 + $0x78] sm:$0xff]
  %v50 = vunpack.c.l.b16 %v18
  %v51 = vunpack.c.l.b16 %v19
  %v52 = vunpack.c.l.b16 %v20
  %v53 = vunpack.c.l.b16 %v21
  %v54 = vunpack.c.l.b16 %v22
  %v55 = vunpack.c.l.b16 %v23
  %v56 = vunpack.c.l.b16 %v24
  %v57 = vunpack.c.l.b16 %v25
  %v58 = vpack.c.b16 %v51, %v50
  %v59 = vpack.c.b16 %v53, %v52
  %v60 = vpack.c.b16 %v55, %v54
  %v61 = vpack.c.b16 %v57, %v56
  %v82 = vunpack.c.l.b16 %v26
  %v83 = vunpack.c.h.b16 %v26
  %v84 = vunpack.c.l.b16 %v27
  %v85 = vunpack.c.h.b16 %v27
  %v86 = vunpack.c.l.b16 %v28
  %v87 = vunpack.c.h.b16 %v28
  %v88 = vunpack.c.l.b16 %v29
  %v89 = vunpack.c.h.b16 %v29
  %v90 = vunpack.c.l.b16 %v30
  %v91 = vunpack.c.h.b16 %v30
  %v92 = vunpack.c.l.b16 %v31
  %v93 = vunpack.c.h.b16 %v31
  %v94 = vunpack.c.l.b16 %v32
  %v95 = vunpack.c.h.b16 %v32
  %v96 = vunpack.c.l.b16 %v33
  %v97 = vunpack.c.h.b16 %v33
  %v98 = vunpack.c.l.b16 %v34
  %v99 = vunpack.c.h.b16 %v34
  %v100 = vunpack.c.l.b16 %v35
  %v101 = vunpack.c.h.b16 %v35
  %v102 = vunpack.c.l.b16 %v36
  %v103 = vunpack.c.h.b16 %v36
  %v104 = vunpack.c.l.b16 %v37
  %v105 = vunpack.c.h.b16 %v37
  %v106 = vunpack.c.l.b16 %v38
  %v107 = vunpack.c.h.b16 %v38
  %v108 = vunpack.c.l.b16 %v39
  %v109 = vunpack.c.h.b16 %v39
  %v110 = vunpack.c.l.b16 %v40
  %v111 = vunpack.c.h.b16 %v40
  %v112 = vunpack.c.l.b16 %v41
  %v113 = vunpack.c.h.b16 %v41
  %v114 = vpack.c.b16 %v84, %v82
  %v115 = vpack.c.b16 %v85, %v83
  %v116 = vpack.c.b16 %v88, %v86
  %v117 = vpack.c.b16 %v89, %v87
  %v118 = vpack.c.b16 %v92, %v90
  %v119 = vpack.c.b16 %v93, %v91
  %v120 = vpack.c.b16 %v96, %v94
  %v121 = vpack.c.b16 %v97, %v95
  %v122 = vpack.c.b16 %v100, %v98
  %v123 = vpack.c.b16 %v101, %v99
  %v124 = vpack.c.b16 %v104, %v102
  %v125 = vpack.c.b16 %v105, %v103
  %v126 = vpack.c.b16 %v108, %v106
  %v127 = vpack.c.b16 %v109, %v107
  %v128 = vpack.c.b16 %v112, %v110
  %v129 = vpack.c.b16 %v113, %v111
  %146 = vmatprep.subr.bf16.mxu0 %v115
  %147 = vmatpush1.bf16.msra.mxu0 %v114
  %148 = vmatprep.subr.bf16.mxu0 %v117
  %149 = vmatpush1.bf16.msra.mxu0 %v116
  %150 = vmatprep.subr.bf16.mxu0 %v119
  %151 = vmatpush1.bf16.msra.mxu0 %v118
  %152 = vmatprep.subr.bf16.mxu0 %v121
  %153 = vmatpush1.bf16.msra.mxu0 %v120
  %154 = vmatprep.subr.bf16.mxu0 %v123
  %155 = vmatpush1.bf16.msra.mxu0 %v122
  %156 = vmatprep.subr.bf16.mxu0 %v125
  %157 = vmatpush1.bf16.msra.mxu0 %v124
  %158 = vmatprep.subr.bf16.mxu0 %v127
  %159 = vmatpush1.bf16.msra.mxu0 %v126
  %160 = vmatprep.subr.bf16.mxu0 %v129
  %161 = vmatpush1.bf16.msra.mxu0 %v128
  %162 = vmatprep.subr.bf16.mxu0 0
  %163 = vmatpush1.bf16.msra.mxu0 0
  %164 = vmatprep.subr.bf16.mxu0 0
  %165 = vmatpush1.bf16.msra.mxu0 0
  %166 = vmatprep.subr.bf16.mxu0 0
  %167 = vmatpush1.bf16.msra.mxu0 0
  %168 = vmatprep.subr.bf16.mxu0 0
  %169 = vmatpush1.bf16.msra.mxu0 0
  %170 = vmatprep.subr.bf16.mxu0 0
  %171 = vmatpush1.bf16.msra.mxu0 0
  %172 = vmatprep.subr.bf16.mxu0 0
  %173 = vmatpush1.bf16.msra.mxu0 0
  %174 = vmatprep.subr.bf16.mxu0 0
  %175 = vmatpush1.bf16.msra.mxu0 0
  %176 = vmatprep.subr.bf16.mxu0 0
  %177 = vmatpush1.bf16.msra.mxu0 0
  %178 = vmatprep.mubr.bf16.mxu0 0
  %179 = vmatmul.mubr.bf16.gmra.mrb[0].mxu0 %v58
  %v180 = vpop.f32.mrb[0].mxu0
  %v181 = vadd.f32 0.0, %v180
  %v182 = vpop.f32.mrb[0].mxu0
  %v183 = vadd.f32 0.0, %v182
  %v184 = vpop.f32.mrb[0].mxu0
  %v185 = vadd.f32 0.0, %v184
  %v186 = vpop.f32.mrb[0].mxu0
  %v187 = vadd.f32 0.0, %v186
  %188 = vmatprep.mubr.bf16.mxu0 0
  %189 = vmatmul.mubr.bf16.gmra.mrb[0].mxu0 %v59
  %v190 = vpop.f32.mrb[0].mxu0
  %v191 = vadd.f32 0.0, %v190
  %v192 = vpop.f32.mrb[0].mxu0
  %v193 = vadd.f32 0.0, %v192
  %v194 = vpop.f32.mrb[0].mxu0
  %v195 = vadd.f32 0.0, %v194
  %v196 = vpop.f32.mrb[0].mxu0
  %v197 = vadd.f32 0.0, %v196
  %198 = vmatprep.mubr.bf16.mxu0 0
  %199 = vmatmul.mubr.bf16.gmra.mrb[0].mxu0 %v60
  %v200 = vpop.f32.mrb[0].mxu0
  %v201 = vadd.f32 0.0, %v200
  %v202 = vpop.f32.mrb[0].mxu0
  %v203 = vadd.f32 0.0, %v202
  %v204 = vpop.f32.mrb[0].mxu0
  %v205 = vadd.f32 0.0, %v204
  %v206 = vpop.f32.mrb[0].mxu0
  %v207 = vadd.f32 0.0, %v206
  %208 = vmatprep.mubr.bf16.mxu0 0
  %209 = vmatmul.mubr.bf16.gmra.mrb[0].mxu0 %v61
  %v210 = vpop.f32.mrb[0].mxu0
  %v211 = vadd.f32 0.0, %v210
  %v212 = vpop.f32.mrb[0].mxu0
  %v213 = vadd.f32 0.0, %v212
  %v214 = vpop.f32.mrb[0].mxu0
  %v215 = vadd.f32 0.0, %v214
  %v216 = vpop.f32.mrb[0].mxu0
  %v217 = vadd.f32 0.0, %v216
  %218 = vdwg.mxu0
  %v219 = vmul.f32 %v181, %v181
  %v220 = vmul.f32 %v185, %v185
  %v221 = vmul.f32 %v191, %v191
  %v222 = vmul.f32 %v195, %v195
  %v223 = vmul.f32 %v183, %v183
  %v224 = vmul.f32 %v187, %v187
  %v225 = vmul.f32 %v193, %v193
  %v226 = vmul.f32 %v197, %v197
  %v227 = vadd.f32 %v219, %v223
  %v228 = vadd.f32 %v220, %v224
  %v229 = vadd.f32 %v221, %v225
  %v230 = vadd.f32 %v222, %v226
  %v231 = vmul.f32 %v201, %v201
  %v232 = vmul.f32 %v205, %v205
  %v233 = vmul.f32 %v211, %v211
  %v234 = vmul.f32 %v215, %v215
  %v235 = vmul.f32 %v203, %v203
  %v236 = vmul.f32 %v207, %v207
  %v237 = vmul.f32 %v213, %v213
  %v238 = vmul.f32 %v217, %v217
  %v239 = vadd.f32 %v231, %v235
  %v240 = vadd.f32 %v232, %v236
  %v241 = vadd.f32 %v233, %v237
  %v242 = vadd.f32 %v234, %v238
  %v243 = vrsqrt.pop %v227
  %v244 = vmul.f32 %v227, %v243
  %vm245 = vcmp.eq.f32.partialorder %v227, inf
  %v246 = vsel %vm245, %v227, %v244
  %vm247 = vcmp.eq.f32.partialorder %v227, 0.0
  %v248 = vand.u32 %v227, 2147483648
  %v249 = vsel %vm247, %v248, %v246
  %v250 = vrsqrt.pop %v228
  %v251 = vmul.f32 %v228, %v250
  %vm252 = vcmp.eq.f32.partialorder %v228, inf
  %v253 = vsel %vm252, %v228, %v251
  %vm254 = vcmp.eq.f32.partialorder %v228, 0.0
  %v255 = vand.u32 %v228, 2147483648
  %v256 = vsel %vm254, %v255, %v253
  %v257 = vrsqrt.pop %v229
  %v258 = vmul.f32 %v229, %v257
  %vm259 = vcmp.eq.f32.partialorder %v229, inf
  %v260 = vsel %vm259, %v229, %v258
  %vm261 = vcmp.eq.f32.partialorder %v229, 0.0
  %v262 = vand.u32 %v229, 2147483648
  %v263 = vsel %vm261, %v262, %v260
  %v264 = vrsqrt.pop %v230
  %v265 = vmul.f32 %v230, %v264
  %vm266 = vcmp.eq.f32.partialorder %v230, inf
  %v267 = vsel %vm266, %v230, %v265
  %vm268 = vcmp.eq.f32.partialorder %v230, 0.0
  %v269 = vand.u32 %v230, 2147483648
  %v270 = vsel %vm268, %v269, %v267
  %v271 = vrsqrt.pop %v239
  %v272 = vmul.f32 %v239, %v271
  %vm273 = vcmp.eq.f32.partialorder %v239, inf
  %v274 = vsel %vm273, %v239, %v272
  %vm275 = vcmp.eq.f32.partialorder %v239, 0.0
  %v276 = vand.u32 %v239, 2147483648
  %v277 = vsel %vm275, %v276, %v274
  %v278 = vrsqrt.pop %v240
  %v279 = vmul.f32 %v240, %v278
  %vm280 = vcmp.eq.f32.partialorder %v240, inf
  %v281 = vsel %vm280, %v240, %v279
  %vm282 = vcmp.eq.f32.partialorder %v240, 0.0
  %v283 = vand.u32 %v240, 2147483648
  %v284 = vsel %vm282, %v283, %v281
  %v285 = vrsqrt.pop %v241
  %v286 = vmul.f32 %v241, %v285
  %vm287 = vcmp.eq.f32.partialorder %v241, inf
  %v288 = vsel %vm287, %v241, %v286
  %vm289 = vcmp.eq.f32.partialorder %v241, 0.0
  %v290 = vand.u32 %v241, 2147483648
  %v291 = vsel %vm289, %v290, %v288
  %v292 = vrsqrt.pop %v242
  %v293 = vmul.f32 %v242, %v292
  %vm294 = vcmp.eq.f32.partialorder %v242, inf
  %v295 = vsel %vm294, %v242, %v293
  %vm296 = vcmp.eq.f32.partialorder %v242, 0.0
  %v297 = vand.u32 %v242, 2147483648
  %v298 = vsel %vm296, %v297, %v295
  %v299 = vsub.f32 %v249, %v277
  %v300 = vsub.f32 %v256, %v284
  %v301 = vsub.f32 %v263, %v291
  %v302 = vsub.f32 %v270, %v298
  %v303 = vld [vmem:[%s2] sm:$0xff]
  %v304 = vmul.f32 %v299, %v299
  %v305 = vmul.f32 %v300, %v300
  %v306 = vmul.f32 %v301, %v301
  %v307 = vmul.f32 %v302, %v302
  %v308 = vadd.f32 %v304, %v305
  %v309 = vadd.f32 %v308, %v306
  %v310 = vadd.f32 %v309, %v307
  %v311 = vadd.f32 %v303, %v310
  %312 = vst [vmem:[%s2] sm:$0xff] %v311
  %v313 = vsub.f32 %v181, %v201
  %v314 = vsub.f32 %v185, %v205
  %v315 = vsub.f32 %v191, %v211
  %v316 = vsub.f32 %v195, %v215
  %v317 = vsub.f32 %v183, %v203
  %v318 = vsub.f32 %v187, %v207
  %v319 = vsub.f32 %v193, %v213
  %v320 = vsub.f32 %v197, %v217
  %v321 = vld [vmem:[%s2 + $0x8] sm:$0xff]
  %v322 = vmul.f32 %v313, %v313
  %v323 = vmul.f32 %v314, %v314
  %v324 = vmul.f32 %v315, %v315
  %v325 = vmul.f32 %v316, %v316
  %v326 = vmul.f32 %v317, %v317
  %v327 = vmul.f32 %v318, %v318
  %v328 = vmul.f32 %v319, %v319
  %v329 = vmul.f32 %v320, %v320
  %v330 = vadd.f32 %v322, %v326
  %v331 = vadd.f32 %v323, %v327
  %v332 = vadd.f32 %v324, %v328
  %v333 = vadd.f32 %v325, %v329
  %v334 = vadd.f32 %v330, %v331
  %v335 = vadd.f32 %v334, %v332
  %v336 = vadd.f32 %v335, %v333
  %v337 = vadd.f32 %v321, %v336
  %338 = vst [vmem:[%s2 + $0x8] sm:$0xff] %v337
  // Predicated region
  $region14: #{_lambda_.3} parent=0 // pred_check
    _
  $region15: #{_lambda_.3} parent=0 // pred_check_branch
    %340 = sbr.rel (0) target = $region17
  $region16: #{_lambda_.3} parent=0 // pred_region
    _
  $region17: #{_lambda_.3} parent=0 // pred_fallthru
    _
  // Predicated region
  $region18: #{_lambda_.3} parent=0 // pred_check
    _
  $region19: #{_lambda_.3} parent=0 // pred_check_branch
    %342 = sbr.rel (0) target = $region21
  $region20: #{_lambda_.3} parent=0 // pred_region
    _
  $region21: #{_lambda_.3} parent=0 // pred_fallthru
    _

</llo_original>
